<compile_context>
chip_gen: v7x
topology: tpu7x:2x2x1
jax: 0.10.0
libtpu: 0.0.40
codegen_flags: <defaults>
</compile_context>

<pallas_src>
import jax
import jax.numpy as jnp
from jax.experimental import pallas as pl
from jax.experimental.pallas import tpu as pltpu


def add_relu_conv1x1_kernel(a_ref, b_ref, w_ref, o_ref):
    # Fused elementwise add + ReLU in f32 (VPU).
    x = jnp.maximum(a_ref[...] + b_ref[...], 0.0)
    w = w_ref[...]
    # 1x1 conv as a single MXU matmul.  Activation operand is cast to the
    # weight's dtype (no-op when the weight is f32), f32 accumulation always.
    o_ref[...] = jnp.dot(w, x.astype(w.dtype), preferred_element_type=jnp.float32)


def _tpu_flavor():
    """Returns (is_v5e, is_v7x); unknown backends fall back to (False, False)."""
    try:
        kind = jax.devices()[0].device_kind.lower()
    except Exception:  # pragma: no cover - defensive
        kind = ""
    is_v5e = ("v5" in kind) and (("lite" in kind) or ("v5e" in kind))
    is_v7 = "v7" in kind
    return is_v5e, is_v7


def add_relu_conv1x1(x201, x215, weight):
    """x201, x215: NCHW float32 [1, C_in, H, W]; weight: [C_out, C_in, 1, 1]."""
    N, C_in, H, W = x201.shape
    C_out = weight.shape[0]
    assert N == 1, "free NCHW -> (C, H*W) reshape is only valid for N == 1"
    # TODO(synk): for N > 1, keep a (N, C, HW) 3-D layout and add a grid axis
    # over the batch instead of this flat reshape.
    HW = H * W

    is_v5e, is_v7 = _tpu_flavor()
    # bf16 matmul operands only where it matters (v5e); f32 on v6e/v7x/unknown.
    compute_dtype = jnp.bfloat16 if is_v5e else jnp.float32

    # Metadata-only reshapes; the weight reshape + (possible) cast happens once
    # outside the kernel and is constant-foldable under jit for a model param.
    a2d = x201.reshape(C_in, HW)
    b2d = x215.reshape(C_in, HW)
    w2d = weight.reshape(C_out, C_in).astype(compute_dtype)

    w_bytes = C_out * C_in * jnp.dtype(compute_dtype).itemsize
    cost = pl.CostEstimate(
        flops=2 * C_out * C_in * HW + 2 * C_in * HW,  # matmul + add/relu
        transcendentals=0,
        bytes_accessed=2 * C_in * HW * 4 + w_bytes + C_out * HW * 4,
    )

    # Engage both TensorCores on v7x with a 2-way parallel split over C_out.
    n_cores = 2 if (is_v7 and C_out % 2 == 0 and (C_out // 2) % 8 == 0) else 1

    if n_cores > 1:
        co_blk = C_out // n_cores
        call = pl.pallas_call(
            add_relu_conv1x1_kernel,
            out_shape=jax.ShapeDtypeStruct((C_out, HW), jnp.float32),
            grid=(n_cores,),
            in_specs=[
                pl.BlockSpec((C_in, HW), lambda i: (0, 0)),
                pl.BlockSpec((C_in, HW), lambda i: (0, 0)),
                pl.BlockSpec((co_blk, C_in), lambda i: (i, 0)),
            ],
            out_specs=pl.BlockSpec((co_blk, HW), lambda i: (i, 0)),
            compiler_params=pltpu.CompilerParams(
                dimension_semantics=("parallel",),
                vmem_limit_bytes=8 * 1024 * 1024,
            ),
            cost_estimate=cost,
        )
    else:
        call = pl.pallas_call(
            add_relu_conv1x1_kernel,
            out_shape=jax.ShapeDtypeStruct((C_out, HW), jnp.float32),
            in_specs=[
                pl.BlockSpec((C_in, HW), lambda: (0, 0)),
                pl.BlockSpec((C_in, HW), lambda: (0, 0)),
                pl.BlockSpec((C_out, C_in), lambda: (0, 0)),
            ],
            out_specs=pl.BlockSpec((C_out, HW), lambda: (0, 0)),
            compiler_params=pltpu.CompilerParams(
                vmem_limit_bytes=8 * 1024 * 1024,
            ),
            cost_estimate=cost,
        )

    out2d = call(a2d, b2d, w2d)
    # (C_out, H*W) -> (1, C_out, H, W): free reshape back to NCHW.
    return out2d.reshape(N, C_out, H, W)


if __name__ == "__main__":
    key = jax.random.PRNGKey(0)
    k1, k2, k3 = jax.random.split(key, 3)

    N, C, Hs, Ws = 1, 336, 14, 14  # shapes implied by the module
    x201 = jax.random.normal(k1, (N, C, Hs, Ws), dtype=jnp.float32)
    x215 = jax.random.normal(k2, (N, C, Hs, Ws), dtype=jnp.float32)
    # Deterministic synthetic conv weight [C_out, C_in, 1, 1]
    weight = (jax.random.normal(k3, (C, C, 1, 1), dtype=jnp.float32)
              * (1.0 / jnp.sqrt(C)))

    out = add_relu_conv1x1(x201, x215, weight)
    out = jax.block_until_ready(out)

    # Reference check in plain JAX (f32 math).  On v5e the kernel uses bf16
    # MXU operands with f32 accumulation, so tolerance is loosened there.
    relu = jnp.maximum(x201 + x215, 0.0)
    ref = jnp.einsum("nchw,oc->nohw", relu, weight.reshape(C, C))
    assert out.shape == (N, C, Hs, Ws)
    used_bf16 = _tpu_flavor()[0]
    tol = 5e-2 if used_bf16 else 2e-4
    assert jnp.allclose(out, ref, atol=tol, rtol=tol), (
        float(jnp.max(jnp.abs(out - ref))))

    print("KERNEL_OK")
</pallas_src>

<mosaic_0001>
module attributes {stable_mosaic.version = 11 : i64} {
  func.func @add_relu_conv1x1_kernel(%arg0: memref<336x196xf32, #tpu.memory_space<vmem>>, %arg1: memref<336x196xf32, #tpu.memory_space<vmem>>, %arg2: memref<336x336xf32, #tpu.memory_space<vmem>>, %arg3: memref<336x196xf32, #tpu.memory_space<vmem>>) attributes {dimension_semantics = [], scalar_prefetch = 0 : i64, scratch_operands = 0 : i64, tpu.core_type = #tpu.core_type<tc>} {
    %c0 = arith.constant 0 : index
    %c0_0 = arith.constant 0 : index
    %0 = vector.load %arg0[%c0, %c0_0] : memref<336x196xf32, #tpu.memory_space<vmem>>, vector<336x196xf32>
    %c0_1 = arith.constant 0 : index
    %c0_2 = arith.constant 0 : index
    %1 = vector.load %arg1[%c0_1, %c0_2] : memref<336x196xf32, #tpu.memory_space<vmem>>, vector<336x196xf32>
    %2 = arith.addf %0, %1 : vector<336x196xf32>
    %cst = arith.constant 0.000000e+00 : f32
    %3 = vector.broadcast %cst : f32 to vector<336x196xf32>
    %4 = arith.maximumf %2, %3 : vector<336x196xf32>
    %c0_3 = arith.constant 0 : index
    %c0_4 = arith.constant 0 : index
    %5 = vector.load %arg2[%c0_3, %c0_4] : memref<336x336xf32, #tpu.memory_space<vmem>>, vector<336x336xf32>
    %cst_5 = arith.constant dense<0.000000e+00> : vector<336x196xf32>
    %6 = tpu.matmul %5, %4, %cst_5 {dimension_numbers = #tpu.dot_dimension_numbers<[1], [0], [0], [1], [0, 0, 1, 1], [], []>} : vector<336x336xf32>, vector<336x196xf32>, vector<336x196xf32> -> vector<336x196xf32>
    %c0_6 = arith.constant 0 : index
    %c0_7 = arith.constant 0 : index
    %7 = vector.load %arg3[%c0_6, %c0_7] : memref<336x196xf32, #tpu.memory_space<vmem>>, vector<336x196xf32>
    tpu.vector_store %arg3[%c0_6, %c0_7], %6 {strides = array<i32>} : memref<336x196xf32, #tpu.memory_space<vmem>>, vector<336x196xf32>,
    return
  }
}

</mosaic_0001>

<llo_original>
// kernel: tpu_custom_call.1
$region0: #{tpu_custom_call.1}
  #allocation0 [shape = 'u32[]', space=smem, size = 0x4, offset = 0x4, fixed_abs, tag = 'smem constant byte address 0x4 - core index']
  #allocation1 [shape = 'u32[144,128]{1,0:T(1,128)}', space=vmem, size = 0x12000, scoped, tag = 'internal scratch']
  %s0 = inlined_call_operand.vmem [shape: f32[336,196], index: 0, kind: input, shape index: {}]
  %s1 = inlined_call_operand.vmem [shape: f32[336,196], index: 1, kind: input, shape index: {}]
  %s2 = inlined_call_operand.vmem [shape: f32[336,336], index: 2, kind: input, shape index: {}]
  %s3 = inlined_call_operand.vmem [shape: f32[336,196], index: 3, kind: output, shape index: {}]
  %s4 = sld [smem:[#allocation0]]
  $region22: #{tpu_custom_call.1} parent=0
    _
  %s6 = ssub.s32 1, %s4
  %s7 = scalar_select 0, %s6, %s4
  // Predicated region
  $region2: #{tpu_custom_call.1} parent=0 // pred_check
    _
  $region3: #{tpu_custom_call.1} parent=0 // pred_check_branch
    %9 = sbr.rel (0) target = $region5
  $region4: #{tpu_custom_call.1} parent=0 // pred_region
    _
  $region5: #{tpu_custom_call.1} parent=0 // pred_fallthru
    _
  // Predicated region
  $region6: #{tpu_custom_call.1} parent=0 // pred_check
    _
  $region7: #{tpu_custom_call.1} parent=0 // pred_check_branch
    %11 = sbr.rel (0) target = $region9
  $region8: #{tpu_custom_call.1} parent=0 // pred_region
    _
  $region9: #{tpu_custom_call.1} parent=0 // pred_fallthru
    _
  // Predicated region
  $region10: #{tpu_custom_call.1} parent=0 // pred_check
    _
  $region11: #{tpu_custom_call.1} parent=0 // pred_check_branch
    %13 = sbr.rel (0) target = $region13
  $region12: #{tpu_custom_call.1} parent=0 // pred_region
    _
  $region13: #{tpu_custom_call.1} parent=0 // pred_fallthru
    _
  %v14 = vld [vmem:[%s0] sm:$0xff]
  %v15 = vld [vmem:[%s0 + $0x8] sm:$0xff]
  %v16 = vld [vmem:[%s0 + $0x10] sm:$0xff]
  %v17 = vld [vmem:[%s0 + $0x18] sm:$0xff]
  %v18 = vld [vmem:[%s0 + $0x20] sm:$0xff]
  %v19 = vld [vmem:[%s0 + $0x28] sm:$0xff]
  %v20 = vld [vmem:[%s0 + $0x30] sm:$0xff]
  %v21 = vld [vmem:[%s0 + $0x38] sm:$0xff]
  %v22 = vld [vmem:[%s0 + $0x40] sm:$0xff]
  %v23 = vld [vmem:[%s0 + $0x48] sm:$0xff]
  %v24 = vld [vmem:[%s0 + $0x50] sm:$0xff]
  %v25 = vld [vmem:[%s0 + $0x58] sm:$0xff]
  %v26 = vld [vmem:[%s0 + $0x60] sm:$0xff]
  %v27 = vld [vmem:[%s0 + $0x68] sm:$0xff]
  %v28 = vld [vmem:[%s0 + $0x70] sm:$0xff]
  %v29 = vld [vmem:[%s0 + $0x78] sm:$0xff]
  %v30 = vld [vmem:[%s0 + $0x80] sm:$0xff]
  %v31 = vld [vmem:[%s0 + $0x88] sm:$0xff]
  %v32 = vld [vmem:[%s0 + $0x90] sm:$0xff]
  %v33 = vld [vmem:[%s0 + $0x98] sm:$0xff]
  %v34 = vld [vmem:[%s0 + $0xa0] sm:$0xff]
  %v35 = vld [vmem:[%s0 + $0xa8] sm:$0xff]
  %v36 = vld [vmem:[%s0 + $0xb0] sm:$0xff]
  %v37 = vld [vmem:[%s0 + $0xb8] sm:$0xff]
  %v38 = vld [vmem:[%s0 + $0xc0] sm:$0xff]
  %v39 = vld [vmem:[%s0 + $0xc8] sm:$0xff]
  %v40 = vld [vmem:[%s0 + $0xd0] sm:$0xff]
  %v41 = vld [vmem:[%s0 + $0xd8] sm:$0xff]
  %v42 = vld [vmem:[%s0 + $0xe0] sm:$0xff]
  %v43 = vld [vmem:[%s0 + $0xe8] sm:$0xff]
  %v44 = vld [vmem:[%s0 + $0xf0] sm:$0xff]
  %v45 = vld [vmem:[%s0 + $0xf8] sm:$0xff]
  %v46 = vld [vmem:[%s0 + $0x100] sm:$0xff]
  %v47 = vld [vmem:[%s0 + $0x108] sm:$0xff]
  %v48 = vld [vmem:[%s0 + $0x110] sm:$0xff]
  %v49 = vld [vmem:[%s0 + $0x118] sm:$0xff]
  %v50 = vld [vmem:[%s0 + $0x120] sm:$0xff]
  %v51 = vld [vmem:[%s0 + $0x128] sm:$0xff]
  %v52 = vld [vmem:[%s0 + $0x130] sm:$0xff]
  %v53 = vld [vmem:[%s0 + $0x138] sm:$0xff]
  %v54 = vld [vmem:[%s0 + $0x140] sm:$0xff]
  %v55 = vld [vmem:[%s0 + $0x148] sm:$0xff]
  %v56 = vld [vmem:[%s0 + $0x150] sm:$0xff]
  %v57 = vld [vmem:[%s0 + $0x158] sm:$0xff]
  %v58 = vld [vmem:[%s0 + $0x160] sm:$0xff]
  %v59 = vld [vmem:[%s0 + $0x168] sm:$0xff]
  %v60 = vld [vmem:[%s0 + $0x170] sm:$0xff]
  %v61 = vld [vmem:[%s0 + $0x178] sm:$0xff]
  %v62 = vld [vmem:[%s0 + $0x180] sm:$0xff]
  %v63 = vld [vmem:[%s0 + $0x188] sm:$0xff]
  %v64 = vld [vmem:[%s0 + $0x190] sm:$0xff]
  %v65 = vld [vmem:[%s0 + $0x198] sm:$0xff]
  %v66 = vld [vmem:[%s0 + $0x1a0] sm:$0xff]
  %v67 = vld [vmem:[%s0 + $0x1a8] sm:$0xff]
  %v68 = vld [vmem:[%s0 + $0x1b0] sm:$0xff]
  %v69 = vld [vmem:[%s0 + $0x1b8] sm:$0xff]
  %v70 = vld [vmem:[%s0 + $0x1c0] sm:$0xff]
  %v71 = vld [vmem:[%s0 + $0x1c8] sm:$0xff]
  %v72 = vld [vmem:[%s0 + $0x1d0] sm:$0xff]
  %v73 = vld [vmem:[%s0 + $0x1d8] sm:$0xff]
  %v74 = vld [vmem:[%s0 + $0x1e0] sm:$0xff]
  %v75 = vld [vmem:[%s0 + $0x1e8] sm:$0xff]
  %v76 = vld [vmem:[%s0 + $0x1f0] sm:$0xff]
  %v77 = vld [vmem:[%s0 + $0x1f8] sm:$0xff]
  %v78 = vld [vmem:[%s0 + $0x200] sm:$0xff]
  %v79 = vld [vmem:[%s0 + $0x208] sm:$0xff]
  %v80 = vld [vmem:[%s0 + $0x210] sm:$0xff]
  %v81 = vld [vmem:[%s0 + $0x218] sm:$0xff]
  %v82 = vld [vmem:[%s0 + $0x220] sm:$0xff]
  %v83 = vld [vmem:[%s0 + $0x228] sm:$0xff]
  %v84 = vld [vmem:[%s0 + $0x230] sm:$0xff]
  %v85 = vld [vmem:[%s0 + $0x238] sm:$0xff]
  %v86 = vld [vmem:[%s0 + $0x240] sm:$0xff]
  %v87 = vld [vmem:[%s0 + $0x248] sm:$0xff]
  %v88 = vld [vmem:[%s0 + $0x250] sm:$0xff]
  %v89 = vld [vmem:[%s0 + $0x258] sm:$0xff]
  %v90 = vld [vmem:[%s0 + $0x260] sm:$0xff]
  %v91 = vld [vmem:[%s0 + $0x268] sm:$0xff]
  %v92 = vld [vmem:[%s0 + $0x270] sm:$0xff]
  %v93 = vld [vmem:[%s0 + $0x278] sm:$0xff]
  %v94 = vld [vmem:[%s0 + $0x280] sm:$0xff]
  %v95 = vld [vmem:[%s0 + $0x288] sm:$0xff]
  %v96 = vld [vmem:[%s0 + $0x290] sm:$0xff]
  %v97 = vld [vmem:[%s0 + $0x298] sm:$0xff]
  %v98 = vld [vmem:[%s1] sm:$0xff]
  %v99 = vld [vmem:[%s1 + $0x8] sm:$0xff]
  %v100 = vld [vmem:[%s1 + $0x10] sm:$0xff]
  %v101 = vld [vmem:[%s1 + $0x18] sm:$0xff]
  %v102 = vld [vmem:[%s1 + $0x20] sm:$0xff]
  %v103 = vld [vmem:[%s1 + $0x28] sm:$0xff]
  %v104 = vld [vmem:[%s1 + $0x30] sm:$0xff]
  %v105 = vld [vmem:[%s1 + $0x38] sm:$0xff]
  %v106 = vld [vmem:[%s1 + $0x40] sm:$0xff]
  %v107 = vld [vmem:[%s1 + $0x48] sm:$0xff]
  %v108 = vld [vmem:[%s1 + $0x50] sm:$0xff]
  %v109 = vld [vmem:[%s1 + $0x58] sm:$0xff]
  %v110 = vld [vmem:[%s1 + $0x60] sm:$0xff]
  %v111 = vld [vmem:[%s1 + $0x68] sm:$0xff]
  %v112 = vld [vmem:[%s1 + $0x70] sm:$0xff]
  %v113 = vld [vmem:[%s1 + $0x78] sm:$0xff]
  %v114 = vld [vmem:[%s1 + $0x80] sm:$0xff]
  %v115 = vld [vmem:[%s1 + $0x88] sm:$0xff]
  %v116 = vld [vmem:[%s1 + $0x90] sm:$0xff]
  %v117 = vld [vmem:[%s1 + $0x98] sm:$0xff]
  %v118 = vld [vmem:[%s1 + $0xa0] sm:$0xff]
  %v119 = vld [vmem:[%s1 + $0xa8] sm:$0xff]
  %v120 = vld [vmem:[%s1 + $0xb0] sm:$0xff]
  %v121 = vld [vmem:[%s1 + $0xb8] sm:$0xff]
  %v122 = vld [vmem:[%s1 + $0xc0] sm:$0xff]
  %v123 = vld [vmem:[%s1 + $0xc8] sm:$0xff]
  %v124 = vld [vmem:[%s1 + $0xd0] sm:$0xff]
  %v125 = vld [vmem:[%s1 + $0xd8] sm:$0xff]
  %v126 = vld [vmem:[%s1 + $0xe0] sm:$0xff]
  %v127 = vld [vmem:[%s1 + $0xe8] sm:$0xff]
  %v128 = vld [vmem:[%s1 + $0xf0] sm:$0xff]
  %v129 = vld [vmem:[%s1 + $0xf8] sm:$0xff]
  %v130 = vld [vmem:[%s1 + $0x100] sm:$0xff]
  %v131 = vld [vmem:[%s1 + $0x108] sm:$0xff]
  %v132 = vld [vmem:[%s1 + $0x110] sm:$0xff]
  %v133 = vld [vmem:[%s1 + $0x118] sm:$0xff]
  %v134 = vld [vmem:[%s1 + $0x120] sm:$0xff]
  %v135 = vld [vmem:[%s1 + $0x128] sm:$0xff]
  %v136 = vld [vmem:[%s1 + $0x130] sm:$0xff]
  %v137 = vld [vmem:[%s1 + $0x138] sm:$0xff]
  %v138 = vld [vmem:[%s1 + $0x140] sm:$0xff]
  %v139 = vld [vmem:[%s1 + $0x148] sm:$0xff]
  %v140 = vld [vmem:[%s1 + $0x150] sm:$0xff]
  %v141 = vld [vmem:[%s1 + $0x158] sm:$0xff]
  %v142 = vld [vmem:[%s1 + $0x160] sm:$0xff]
  %v143 = vld [vmem:[%s1 + $0x168] sm:$0xff]
  %v144 = vld [vmem:[%s1 + $0x170] sm:$0xff]
  %v145 = vld [vmem:[%s1 + $0x178] sm:$0xff]
  %v146 = vld [vmem:[%s1 + $0x180] sm:$0xff]
  %v147 = vld [vmem:[%s1 + $0x188] sm:$0xff]
  %v148 = vld [vmem:[%s1 + $0x190] sm:$0xff]
  %v149 = vld [vmem:[%s1 + $0x198] sm:$0xff]
  %v150 = vld [vmem:[%s1 + $0x1a0] sm:$0xff]
  %v151 = vld [vmem:[%s1 + $0x1a8] sm:$0xff]
  %v152 = vld [vmem:[%s1 + $0x1b0] sm:$0xff]
  %v153 = vld [vmem:[%s1 + $0x1b8] sm:$0xff]
  %v154 = vld [vmem:[%s1 + $0x1c0] sm:$0xff]
  %v155 = vld [vmem:[%s1 + $0x1c8] sm:$0xff]
  %v156 = vld [vmem:[%s1 + $0x1d0] sm:$0xff]
  %v157 = vld [vmem:[%s1 + $0x1d8] sm:$0xff]
  %v158 = vld [vmem:[%s1 + $0x1e0] sm:$0xff]
  %v159 = vld [vmem:[%s1 + $0x1e8] sm:$0xff]
  %v160 = vld [vmem:[%s1 + $0x1f0] sm:$0xff]
  %v161 = vld [vmem:[%s1 + $0x1f8] sm:$0xff]
  %v162 = vld [vmem:[%s1 + $0x200] sm:$0xff]
  %v163 = vld [vmem:[%s1 + $0x208] sm:$0xff]
  %v164 = vld [vmem:[%s1 + $0x210] sm:$0xff]
  %v165 = vld [vmem:[%s1 + $0x218] sm:$0xff]
  %v166 = vld [vmem:[%s1 + $0x220] sm:$0xff]
  %v167 = vld [vmem:[%s1 + $0x228] sm:$0xff]
  %v168 = vld [vmem:[%s1 + $0x230] sm:$0xff]
  %v169 = vld [vmem:[%s1 + $0x238] sm:$0xff]
  %v170 = vld [vmem:[%s1 + $0x240] sm:$0xff]
  %v171 = vld [vmem:[%s1 + $0x248] sm:$0xff]
  %v172 = vld [vmem:[%s1 + $0x250] sm:$0xff]
  %v173 = vld [vmem:[%s1 + $0x258] sm:$0xff]
  %v174 = vld [vmem:[%s1 + $0x260] sm:$0xff]
  %v175 = vld [vmem:[%s1 + $0x268] sm:$0xff]
  %v176 = vld [vmem:[%s1 + $0x270] sm:$0xff]
  %v177 = vld [vmem:[%s1 + $0x278] sm:$0xff]
  %v178 = vld [vmem:[%s1 + $0x280] sm:$0xff]
  %v179 = vld [vmem:[%s1 + $0x288] sm:$0xff]
  %v180 = vld [vmem:[%s1 + $0x290] sm:$0xff]
  %v181 = vld [vmem:[%s1 + $0x298] sm:$0xff]
  %v182 = vadd.f32 %v14, %v98
  %v183 = vadd.f32 %v15, %v99
  %v184 = vadd.f32 %v16, %v100
  %v185 = vadd.f32 %v17, %v101
  %v186 = vadd.f32 %v18, %v102
  %v187 = vadd.f32 %v19, %v103
  %v188 = vadd.f32 %v20, %v104
  %v189 = vadd.f32 %v21, %v105
  %v190 = vadd.f32 %v22, %v106
  %v191 = vadd.f32 %v23, %v107
  %v192 = vadd.f32 %v24, %v108
  %v193 = vadd.f32 %v25, %v109
  %v194 = vadd.f32 %v26, %v110
  %v195 = vadd.f32 %v27, %v111
  %v196 = vadd.f32 %v28, %v112
  %v197 = vadd.f32 %v29, %v113
  %v198 = vadd.f32 %v30, %v114
  %v199 = vadd.f32 %v31, %v115
  %v200 = vadd.f32 %v32, %v116
  %v201 = vadd.f32 %v33, %v117
  %v202 = vadd.f32 %v34, %v118
  %v203 = vadd.f32 %v35, %v119
  %v204 = vadd.f32 %v36, %v120
  %v205 = vadd.f32 %v37, %v121
  %v206 = vadd.f32 %v38, %v122
  %v207 = vadd.f32 %v39, %v123
  %v208 = vadd.f32 %v40, %v124
  %v209 = vadd.f32 %v41, %v125
  %v210 = vadd.f32 %v42, %v126
  %v211 = vadd.f32 %v43, %v127
  %v212 = vadd.f32 %v44, %v128
  %v213 = vadd.f32 %v45, %v129
  %v214 = vadd.f32 %v46, %v130
  %v215 = vadd.f32 %v47, %v131
  %v216 = vadd.f32 %v48, %v132
  %v217 = vadd.f32 %v49, %v133
  %v218 = vadd.f32 %v50, %v134
  %v219 = vadd.f32 %v51, %v135
  %v220 = vadd.f32 %v52, %v136
  %v221 = vadd.f32 %v53, %v137
  %v222 = vadd.f32 %v54, %v138
  %v223 = vadd.f32 %v55, %v139
  %v224 = vadd.f32 %v56, %v140
  %v225 = vadd.f32 %v57, %v141
  %v226 = vadd.f32 %v58, %v142
  %v227 = vadd.f32 %v59, %v143
  %v228 = vadd.f32 %v60, %v144
  %v229 = vadd.f32 %v61, %v145
  %v230 = vadd.f32 %v62, %v146
  %v231 = vadd.f32 %v63, %v147
  %v232 = vadd.f32 %v64, %v148
  %v233 = vadd.f32 %v65, %v149
  %v234 = vadd.f32 %v66, %v150
  %v235 = vadd.f32 %v67, %v151
  %v236 = vadd.f32 %v68, %v152
  %v237 = vadd.f32 %v69, %v153
  %v238 = vadd.f32 %v70, %v154
  %v239 = vadd.f32 %v71, %v155
  %v240 = vadd.f32 %v72, %v156
  %v241 = vadd.f32 %v73, %v157
  %v242 = vadd.f32 %v74, %v158
  %v243 = vadd.f32 %v75, %v159
  %v244 = vadd.f32 %v76, %v160
  %v245 = vadd.f32 %v77, %v161
  %v246 = vadd.f32 %v78, %v162
  %v247 = vadd.f32 %v79, %v163
  %v248 = vadd.f32 %v80, %v164
  %v249 = vadd.f32 %v81, %v165
  %v250 = vadd.f32 %v82, %v166
  %v251 = vadd.f32 %v83, %v167
  %v252 = vadd.f32 %v84, %v168
  %v253 = vadd.f32 %v85, %v169
  %v254 = vadd.f32 %v86, %v170
  %v255 = vadd.f32 %v87, %v171
  %v256 = vadd.f32 %v88, %v172
  %v257 = vadd.f32 %v89, %v173
  %v258 = vadd.f32 %v90, %v174
  %v259 = vadd.f32 %v91, %v175
  %v260 = vadd.f32 %v92, %v176
  %v261 = vadd.f32 %v93, %v177
  %v262 = vadd.f32 %v94, %v178
  %v263 = vadd.f32 %v95, %v179
  %v264 = vadd.f32 %v96, %v180
  %v265 = vadd.f32 %v97, %v181
  %v266 = vmax.f32 %v182, 0.0
  %v267 = vmax.f32 %v183, 0.0
  %v268 = vmax.f32 %v184, 0.0
  %v269 = vmax.f32 %v185, 0.0
  %v270 = vmax.f32 %v186, 0.0
  %v271 = vmax.f32 %v187, 0.0
  %v272 = vmax.f32 %v188, 0.0
  %v273 = vmax.f32 %v189, 0.0
  %v274 = vmax.f32 %v190, 0.0
  %v275 = vmax.f32 %v191, 0.0
  %v276 = vmax.f32 %v192, 0.0
  %v277 = vmax.f32 %v193, 0.0
  %v278 = vmax.f32 %v194, 0.0
  %v279 = vmax.f32 %v195, 0.0
  %v280 = vmax.f32 %v196, 0.0
  %v281 = vmax.f32 %v197, 0.0
  %v282 = vmax.f32 %v198, 0.0
  %v283 = vmax.f32 %v199, 0.0
  %v284 = vmax.f32 %v200, 0.0
  %v285 = vmax.f32 %v201, 0.0
  %v286 = vmax.f32 %v202, 0.0
  %v287 = vmax.f32 %v203, 0.0
  %v288 = vmax.f32 %v204, 0.0
  %v289 = vmax.f32 %v205, 0.0
  %v290 = vmax.f32 %v206, 0.0
  %v291 = vmax.f32 %v207, 0.0
  %v292 = vmax.f32 %v208, 0.0
  %v293 = vmax.f32 %v209, 0.0
  %v294 = vmax.f32 %v210, 0.0
  %v295 = vmax.f32 %v211, 0.0
  %v296 = vmax.f32 %v212, 0.0
  %v297 = vmax.f32 %v213, 0.0
  %v298 = vmax.f32 %v214, 0.0
  %v299 = vmax.f32 %v215, 0.0
  %v300 = vmax.f32 %v216, 0.0
  %v301 = vmax.f32 %v217, 0.0
  %v302 = vmax.f32 %v218, 0.0
  %v303 = vmax.f32 %v219, 0.0
  %v304 = vmax.f32 %v220, 0.0
  %v305 = vmax.f32 %v221, 0.0
  %v306 = vmax.f32 %v222, 0.0
  %v307 = vmax.f32 %v223, 0.0
  %v308 = vmax.f32 %v224, 0.0
  %v309 = vmax.f32 %v225, 0.0
  %v310 = vmax.f32 %v226, 0.0
  %v311 = vmax.f32 %v227, 0.0
  %v312 = vmax.f32 %v228, 0.0
  %v313 = vmax.f32 %v229, 0.0
  %v314 = vmax.f32 %v230, 0.0
  %v315 = vmax.f32 %v231, 0.0
  %v316 = vmax.f32 %v232, 0.0
  %v317 = vmax.f32 %v233, 0.0
  %v318 = vmax.f32 %v234, 0.0
  %v319 = vmax.f32 %v235, 0.0
  %v320 = vmax.f32 %v236, 0.0
  %v321 = vmax.f32 %v237, 0.0
  %v322 = vmax.f32 %v238, 0.0
  %v323 = vmax.f32 %v239, 0.0
  %v324 = vmax.f32 %v240, 0.0
  %v325 = vmax.f32 %v241, 0.0
  %v326 = vmax.f32 %v242, 0.0
  %v327 = vmax.f32 %v243, 0.0
  %v328 = vmax.f32 %v244, 0.0
  %v329 = vmax.f32 %v245, 0.0
  %v330 = vmax.f32 %v246, 0.0
  %v331 = vmax.f32 %v247, 0.0
  %v332 = vmax.f32 %v248, 0.0
  %v333 = vmax.f32 %v249, 0.0
  %v334 = vmax.f32 %v250, 0.0
  %v335 = vmax.f32 %v251, 0.0
  %v336 = vmax.f32 %v252, 0.0
  %v337 = vmax.f32 %v253, 0.0
  %v338 = vmax.f32 %v254, 0.0
  %v339 = vmax.f32 %v255, 0.0
  %v340 = vmax.f32 %v256, 0.0
  %v341 = vmax.f32 %v257, 0.0
  %v342 = vmax.f32 %v258, 0.0
  %v343 = vmax.f32 %v259, 0.0
  %v344 = vmax.f32 %v260, 0.0
  %v345 = vmax.f32 %v261, 0.0
  %v346 = vmax.f32 %v262, 0.0
  %v347 = vmax.f32 %v263, 0.0
  %v348 = vmax.f32 %v264, 0.0
  %v349 = vmax.f32 %v265, 0.0
  %v350 = vld [vmem:[%s2] sm:$0xff]
  %v351 = vld [vmem:[%s2 + $0x8] sm:$0xff]
  %v352 = vld [vmem:[%s2 + $0x10] sm:$0xff]
  %v353 = vld [vmem:[%s2 + $0x18] sm:$0xff]
  %v354 = vld [vmem:[%s2 + $0x20] sm:$0xff]
  %v355 = vld [vmem:[%s2 + $0x28] sm:$0xff]
  %v356 = vld [vmem:[%s2 + $0x30] sm:$0xff]
  %v357 = vld [vmem:[%s2 + $0x38] sm:$0xff]
  %v358 = vld [vmem:[%s2 + $0x40] sm:$0xff]
  %v359 = vld [vmem:[%s2 + $0x48] sm:$0xff]
  %v360 = vld [vmem:[%s2 + $0x50] sm:$0xff]
  %v361 = vld [vmem:[%s2 + $0x58] sm:$0xff]
  %v362 = vld [vmem:[%s2 + $0x60] sm:$0xff]
  %v363 = vld [vmem:[%s2 + $0x68] sm:$0xff]
  %v364 = vld [vmem:[%s2 + $0x70] sm:$0xff]
  %v365 = vld [vmem:[%s2 + $0x78] sm:$0xff]
  %v366 = vld [vmem:[%s2 + $0x80] sm:$0xff]
  %v367 = vld [vmem:[%s2 + $0x88] sm:$0xff]
  %v368 = vld [vmem:[%s2 + $0x90] sm:$0xff]
  %v369 = vld [vmem:[%s2 + $0x98] sm:$0xff]
  %v370 = vld [vmem:[%s2 + $0xa0] sm:$0xff]
  %v371 = vld [vmem:[%s2 + $0xa8] sm:$0xff]
  %v372 = vld [vmem:[%s2 + $0xb0] sm:$0xff]
  %v373 = vld [vmem:[%s2 + $0xb8] sm:$0xff]
  %v374 = vld [vmem:[%s2 + $0xc0] sm:$0xff]
  %v375 = vld [vmem:[%s2 + $0xc8] sm:$0xff]
  %v376 = vld [vmem:[%s2 + $0xd0] sm:$0xff]
  %v377 = vld [vmem:[%s2 + $0xd8] sm:$0xff]
  %v378 = vld [vmem:[%s2 + $0xe0] sm:$0xff]
  %v379 = vld [vmem:[%s2 + $0xe8] sm:$0xff]
  %v380 = vld [vmem:[%s2 + $0xf0] sm:$0xff]
  %v381 = vld [vmem:[%s2 + $0xf8] sm:$0xff]
  %v382 = vld [vmem:[%s2 + $0x100] sm:$0xff]
  %v383 = vld [vmem:[%s2 + $0x108] sm:$0xff]
  %v384 = vld [vmem:[%s2 + $0x110] sm:$0xff]
  %v385 = vld [vmem:[%s2 + $0x118] sm:$0xff]
  %v386 = vld [vmem:[%s2 + $0x120] sm:$0xff]
  %v387 = vld [vmem:[%s2 + $0x128] sm:$0xff]
  %v388 = vld [vmem:[%s2 + $0x130] sm:$0xff]
  %v389 = vld [vmem:[%s2 + $0x138] sm:$0xff]
  %v390 = vld [vmem:[%s2 + $0x140] sm:$0xff]
  %v391 = vld [vmem:[%s2 + $0x148] sm:$0xff]
  %v392 = vld [vmem:[%s2 + $0x150] sm:$0xff]
  %v393 = vld [vmem:[%s2 + $0x158] sm:$0xff]
  %v394 = vld [vmem:[%s2 + $0x160] sm:$0xff]
  %v395 = vld [vmem:[%s2 + $0x168] sm:$0xff]
  %v396 = vld [vmem:[%s2 + $0x170] sm:$0xff]
  %v397 = vld [vmem:[%s2 + $0x178] sm:$0xff]
  %v398 = vld [vmem:[%s2 + $0x180] sm:$0xff]
  %v399 = vld [vmem:[%s2 + $0x188] sm:$0xff]
  %v400 = vld [vmem:[%s2 + $0x190] sm:$0xff]
  %v401 = vld [vmem:[%s2 + $0x198] sm:$0xff]
  %v402 = vld [vmem:[%s2 + $0x1a0] sm:$0xff]
  %v403 = vld [vmem:[%s2 + $0x1a8] sm:$0xff]
  %v404 = vld [vmem:[%s2 + $0x1b0] sm:$0xff]
  %v405 = vld [vmem:[%s2 + $0x1b8] sm:$0xff]
  %v406 = vld [vmem:[%s2 + $0x1c0] sm:$0xff]
  %v407 = vld [vmem:[%s2 + $0x1c8] sm:$0xff]
  %v408 = vld [vmem:[%s2 + $0x1d0] sm:$0xff]
  %v409 = vld [vmem:[%s2 + $0x1d8] sm:$0xff]
  %v410 = vld [vmem:[%s2 + $0x1e0] sm:$0xff]
  %v411 = vld [vmem:[%s2 + $0x1e8] sm:$0xff]
  %v412 = vld [vmem:[%s2 + $0x1f0] sm:$0xff]
  %v413 = vld [vmem:[%s2 + $0x1f8] sm:$0xff]
  %v414 = vld [vmem:[%s2 + $0x200] sm:$0xff]
  %v415 = vld [vmem:[%s2 + $0x208] sm:$0xff]
  %v416 = vld [vmem:[%s2 + $0x210] sm:$0xff]
  %v417 = vld [vmem:[%s2 + $0x218] sm:$0xff]
  %v418 = vld [vmem:[%s2 + $0x220] sm:$0xff]
  %v419 = vld [vmem:[%s2 + $0x228] sm:$0xff]
  %v420 = vld [vmem:[%s2 + $0x230] sm:$0xff]
  %v421 = vld [vmem:[%s2 + $0x238] sm:$0xff]
  %v422 = vld [vmem:[%s2 + $0x240] sm:$0xff]
  %v423 = vld [vmem:[%s2 + $0x248] sm:$0xff]
  %v424 = vld [vmem:[%s2 + $0x250] sm:$0xff]
  %v425 = vld [vmem:[%s2 + $0x258] sm:$0xff]
  %v426 = vld [vmem:[%s2 + $0x260] sm:$0xff]
  %v427 = vld [vmem:[%s2 + $0x268] sm:$0xff]
  %v428 = vld [vmem:[%s2 + $0x270] sm:$0xff]
  %v429 = vld [vmem:[%s2 + $0x278] sm:$0xff]
  %v430 = vld [vmem:[%s2 + $0x280] sm:$0xff]
  %v431 = vld [vmem:[%s2 + $0x288] sm:$0xff]
  %v432 = vld [vmem:[%s2 + $0x290] sm:$0xff]
  %v433 = vld [vmem:[%s2 + $0x298] sm:$0xff]
  %v434 = vld [vmem:[%s2 + $0x2a0] sm:$0xff]
  %v435 = vld [vmem:[%s2 + $0x2a8] sm:$0xff]
  %v436 = vld [vmem:[%s2 + $0x2b0] sm:$0xff]
  %v437 = vld [vmem:[%s2 + $0x2b8] sm:$0xff]
  %v438 = vld [vmem:[%s2 + $0x2c0] sm:$0xff]
  %v439 = vld [vmem:[%s2 + $0x2c8] sm:$0xff]
  %v440 = vld [vmem:[%s2 + $0x2d0] sm:$0xff]
  %v441 = vld [vmem:[%s2 + $0x2d8] sm:$0xff]
  %v442 = vld [vmem:[%s2 + $0x2e0] sm:$0xff]
  %v443 = vld [vmem:[%s2 + $0x2e8] sm:$0xff]
  %v444 = vld [vmem:[%s2 + $0x2f0] sm:$0xff]
  %v445 = vld [vmem:[%s2 + $0x2f8] sm:$0xff]
  %v446 = vld [vmem:[%s2 + $0x300] sm:$0xff]
  %v447 = vld [vmem:[%s2 + $0x308] sm:$0xff]
  %v448 = vld [vmem:[%s2 + $0x310] sm:$0xff]
  %v449 = vld [vmem:[%s2 + $0x318] sm:$0xff]
  %v450 = vld [vmem:[%s2 + $0x320] sm:$0xff]
  %v451 = vld [vmem:[%s2 + $0x328] sm:$0xff]
  %v452 = vld [vmem:[%s2 + $0x330] sm:$0xff]
  %v453 = vld [vmem:[%s2 + $0x338] sm:$0xff]
  %v454 = vld [vmem:[%s2 + $0x340] sm:$0xff]
  %v455 = vld [vmem:[%s2 + $0x348] sm:$0xff]
  %v456 = vld [vmem:[%s2 + $0x350] sm:$0xff]
  %v457 = vld [vmem:[%s2 + $0x358] sm:$0xff]
  %v458 = vld [vmem:[%s2 + $0x360] sm:$0xff]
  %v459 = vld [vmem:[%s2 + $0x368] sm:$0xff]
  %v460 = vld [vmem:[%s2 + $0x370] sm:$0xff]
  %v461 = vld [vmem:[%s2 + $0x378] sm:$0xff]
  %v462 = vld [vmem:[%s2 + $0x380] sm:$0xff]
  %v463 = vld [vmem:[%s2 + $0x388] sm:$0xff]
  %v464 = vld [vmem:[%s2 + $0x390] sm:$0xff]
  %v465 = vld [vmem:[%s2 + $0x398] sm:$0xff]
  %v466 = vld [vmem:[%s2 + $0x3a0] sm:$0xff]
  %v467 = vld [vmem:[%s2 + $0x3a8] sm:$0xff]
  %v468 = vld [vmem:[%s2 + $0x3b0] sm:$0xff]
  %v469 = vld [vmem:[%s2 + $0x3b8] sm:$0xff]
  %v470 = vld [vmem:[%s2 + $0x3c0] sm:$0xff]
  %v471 = vld [vmem:[%s2 + $0x3c8] sm:$0xff]
  %v472 = vld [vmem:[%s2 + $0x3d0] sm:$0xff]
  %v473 = vld [vmem:[%s2 + $0x3d8] sm:$0xff]
  %v474 = vld [vmem:[%s2 + $0x3e0] sm:$0xff]
  %v475 = vld [vmem:[%s2 + $0x3e8] sm:$0xff]
  %vm476 = vcmask 654336
  %v478 = vsel %vm476, %v352, 0
  %v481 = vsel %vm476, %v355, 0
  %v484 = vsel %vm476, %v358, 0
  %v487 = vsel %vm476, %v361, 0
  %v490 = vsel %vm476, %v364, 0
  %v493 = vsel %vm476, %v367, 0
  %v496 = vsel %vm476, %v370, 0
  %v499 = vsel %vm476, %v373, 0
  %v502 = vsel %vm476, %v376, 0
  %v505 = vsel %vm476, %v379, 0
  %v508 = vsel %vm476, %v382, 0
  %v511 = vsel %vm476, %v385, 0
  %v514 = vsel %vm476, %v388, 0
  %v517 = vsel %vm476, %v391, 0
  %v520 = vsel %vm476, %v394, 0
  %v523 = vsel %vm476, %v397, 0
  %v526 = vsel %vm476, %v400, 0
  %v529 = vsel %vm476, %v403, 0
  %v532 = vsel %vm476, %v406, 0
  %v535 = vsel %vm476, %v409, 0
  %v538 = vsel %vm476, %v412, 0
  %v541 = vsel %vm476, %v415, 0
  %v544 = vsel %vm476, %v418, 0
  %v547 = vsel %vm476, %v421, 0
  %v550 = vsel %vm476, %v424, 0
  %v553 = vsel %vm476, %v427, 0
  %v556 = vsel %vm476, %v430, 0
  %v559 = vsel %vm476, %v433, 0
  %v562 = vsel %vm476, %v436, 0
  %v565 = vsel %vm476, %v439, 0
  %v568 = vsel %vm476, %v442, 0
  %v571 = vsel %vm476, %v445, 0
  %v574 = vsel %vm476, %v448, 0
  %v577 = vsel %vm476, %v451, 0
  %v580 = vsel %vm476, %v454, 0
  %v583 = vsel %vm476, %v457, 0
  %v586 = vsel %vm476, %v460, 0
  %v589 = vsel %vm476, %v463, 0
  %v592 = vsel %vm476, %v466, 0
  %v595 = vsel %vm476, %v469, 0
  %v598 = vsel %vm476, %v472, 0
  %v601 = vsel %vm476, %v475, 0
  %603 = vmatprep.subr.mxu0 %v267
  %604 = vmatpush1.msra.mxu0 %v266
  %605 = vmatprep.subr.mxu0 %v269
  %606 = vmatpush1.msra.mxu0 %v268
  %607 = vmatprep.subr.mxu0 %v271
  %608 = vmatpush1.msra.mxu0 %v270
  %609 = vmatprep.subr.mxu0 %v273
  %610 = vmatpush1.msra.mxu0 %v272
  %611 = vmatprep.subr.mxu0 %v275
  %612 = vmatpush1.msra.mxu0 %v274
  %613 = vmatprep.subr.mxu0 %v277
  %614 = vmatpush1.msra.mxu0 %v276
  %615 = vmatprep.subr.mxu0 %v279
  %616 = vmatpush1.msra.mxu0 %v278
  %617 = vmatprep.subr.mxu0 %v281
  %618 = vmatpush1.msra.mxu0 %v280
  %619 = vmatprep.subr.mxu0 %v283
  %620 = vmatpush1.msra.mxu0 %v282
  %621 = vmatprep.subr.mxu0 %v285
  %622 = vmatpush1.msra.mxu0 %v284
  %623 = vmatprep.subr.mxu0 %v287
  %624 = vmatpush1.msra.mxu0 %v286
  %625 = vmatprep.subr.mxu0 %v289
  %626 = vmatpush1.msra.mxu0 %v288
  %627 = vmatprep.subr.mxu0 %v291
  %628 = vmatpush1.msra.mxu0 %v290
  %629 = vmatprep.subr.mxu0 %v293
  %630 = vmatpush1.msra.mxu0 %v292
  %631 = vmatprep.subr.mxu0 %v295
  %632 = vmatpush1.msra.mxu0 %v294
  %633 = vmatprep.subr.mxu0 %v297
  %634 = vmatpush1.msra.mxu0 %v296
  %635 = vmatprep.subr.mxu0 %v299
  %636 = vmatpush1.msra.mxu0 %v298
  %637 = vmatprep.subr.mxu0 %v301
  %638 = vmatpush1.msra.mxu0 %v300
  %639 = vmatprep.subr.mxu0 %v303
  %640 = vmatpush1.msra.mxu0 %v302
  %641 = vmatprep.subr.mxu0 %v305
  %642 = vmatpush1.msra.mxu0 %v304
  %643 = vmatprep.subr.mxu0 %v307
  %644 = vmatpush1.msra.mxu0 %v306
  %645 = vmatprep.subr.mxu0 %v309
  %646 = vmatpush1.msra.mxu0 %v308
  %647 = vmatprep.subr.mxu0 %v311
  %648 = vmatpush1.msra.mxu0 %v310
  %649 = vmatprep.subr.mxu0 %v313
  %650 = vmatpush1.msra.mxu0 %v312
  %651 = vmatprep.subr.mxu0 %v315
  %652 = vmatpush1.msra.mxu0 %v314
  %653 = vmatprep.subr.mxu0 %v317
  %654 = vmatpush1.msra.mxu0 %v316
  %655 = vmatprep.subr.mxu0 %v319
  %656 = vmatpush1.msra.mxu0 %v318
  %657 = vmatprep.subr.mxu0 %v321
  %658 = vmatpush1.msra.mxu0 %v320
  %659 = vmatprep.subr.mxu0 %v323
  %660 = vmatpush1.msra.mxu0 %v322
  %661 = vmatprep.subr.mxu0 %v325
  %662 = vmatpush1.msra.mxu0 %v324
  %663 = vmatprep.subr.mxu0 %v327
  %664 = vmatpush1.msra.mxu0 %v326
  %665 = vmatprep.subr.mxu0 %v329
  %666 = vmatpush1.msra.mxu0 %v328
  %667 = vmatprep.mubr.f32.mxu0 %v351
  %668 = vmatmul.mubr.f32.gmra.mrb[0].mxu0 %v350
  %v669 = vpop.f32.mrb[0].mxu0
  %v670 = vadd.f32 0.0, %v669
  %v671 = vpop.f32.mrb[0].mxu0
  %v672 = vadd.f32 0.0, %v671
  %673 = vmatprep.mubr.f32.mxu0 %v354
  %674 = vmatmul.mubr.f32.gmra.mrb[0].mxu0 %v353
  %v675 = vpop.f32.mrb[0].mxu0
  %v676 = vadd.f32 0.0, %v675
  %v677 = vpop.f32.mrb[0].mxu0
  %v678 = vadd.f32 0.0, %v677
  %679 = vmatprep.mubr.f32.mxu0 %v357
  %680 = vmatmul.mubr.f32.gmra.mrb[0].mxu0 %v356
  %v681 = vpop.f32.mrb[0].mxu0
  %v682 = vadd.f32 0.0, %v681
  %v683 = vpop.f32.mrb[0].mxu0
  %v684 = vadd.f32 0.0, %v683
  %685 = vmatprep.mubr.f32.mxu0 %v360
  %686 = vmatmul.mubr.f32.gmra.mrb[0].mxu0 %v359
  %v687 = vpop.f32.mrb[0].mxu0
  %v688 = vadd.f32 0.0, %v687
  %v689 = vpop.f32.mrb[0].mxu0
  %v690 = vadd.f32 0.0, %v689
  %691 = vmatprep.mubr.f32.mxu0 %v363
  %692 = vmatmul.mubr.f32.gmra.mrb[0].mxu0 %v362
  %v693 = vpop.f32.mrb[0].mxu0
  %v694 = vadd.f32 0.0, %v693
  %v695 = vpop.f32.mrb[0].mxu0
  %v696 = vadd.f32 0.0, %v695
  %697 = vmatprep.mubr.f32.mxu0 %v366
  %698 = vmatmul.mubr.f32.gmra.mrb[0].mxu0 %v365
  %v699 = vpop.f32.mrb[0].mxu0
  %v700 = vadd.f32 0.0, %v699
  %v701 = vpop.f32.mrb[0].mxu0
  %v702 = vadd.f32 0.0, %v701
  %703 = vmatprep.mubr.f32.mxu0 %v369
  %704 = vmatmul.mubr.f32.gmra.mrb[0].mxu0 %v368
  %v705 = vpop.f32.mrb[0].mxu0
  %v706 = vadd.f32 0.0, %v705
  %v707 = vpop.f32.mrb[0].mxu0
  %v708 = vadd.f32 0.0, %v707
  %709 = vmatprep.mubr.f32.mxu0 %v372
  %710 = vmatmul.mubr.f32.gmra.mrb[0].mxu0 %v371
  %v711 = vpop.f32.mrb[0].mxu0
  %v712 = vadd.f32 0.0, %v711
  %v713 = vpop.f32.mrb[0].mxu0
  %v714 = vadd.f32 0.0, %v713
  %715 = vmatprep.mubr.f32.mxu0 %v375
  %716 = vmatmul.mubr.f32.gmra.mrb[0].mxu0 %v374
  %v717 = vpop.f32.mrb[0].mxu0
  %v718 = vadd.f32 0.0, %v717
  %v719 = vpop.f32.mrb[0].mxu0
  %v720 = vadd.f32 0.0, %v719
  %721 = vmatprep.mubr.f32.mxu0 %v378
  %722 = vmatmul.mubr.f32.gmra.mrb[0].mxu0 %v377
  %v723 = vpop.f32.mrb[0].mxu0
  %v724 = vadd.f32 0.0, %v723
  %v725 = vpop.f32.mrb[0].mxu0
  %v726 = vadd.f32 0.0, %v725
  %727 = vmatprep.mubr.f32.mxu0 %v381
  %728 = vmatmul.mubr.f32.gmra.mrb[0].mxu0 %v380
  %v729 = vpop.f32.mrb[0].mxu0
  %v730 = vadd.f32 0.0, %v729
  %v731 = vpop.f32.mrb[0].mxu0
  %v732 = vadd.f32 0.0, %v731
  %733 = vmatprep.mubr.f32.mxu0 %v384
  %734 = vmatmul.mubr.f32.gmra.mrb[0].mxu0 %v383
  %v735 = vpop.f32.mrb[0].mxu0
  %v736 = vadd.f32 0.0, %v735
  %v737 = vpop.f32.mrb[0].mxu0
  %v738 = vadd.f32 0.0, %v737
  %739 = vmatprep.mubr.f32.mxu0 %v387
  %740 = vmatmul.mubr.f32.gmra.mrb[0].mxu0 %v386
  %v741 = vpop.f32.mrb[0].mxu0
  %v742 = vadd.f32 0.0, %v741
  %v743 = vpop.f32.mrb[0].mxu0
  %v744 = vadd.f32 0.0, %v743
  %745 = vmatprep.mubr.f32.mxu0 %v390
  %746 = vmatmul.mubr.f32.gmra.mrb[0].mxu0 %v389
  %v747 = vpop.f32.mrb[0].mxu0
  %v748 = vadd.f32 0.0, %v747
  %v749 = vpop.f32.mrb[0].mxu0
  %v750 = vadd.f32 0.0, %v749
  %751 = vmatprep.mubr.f32.mxu0 %v393
  %752 = vmatmul.mubr.f32.gmra.mrb[0].mxu0 %v392
  %v753 = vpop.f32.mrb[0].mxu0
  %v754 = vadd.f32 0.0, %v753
  %v755 = vpop.f32.mrb[0].mxu0
  %v756 = vadd.f32 0.0, %v755
  %757 = vmatprep.mubr.f32.mxu0 %v396
  %758 = vmatmul.mubr.f32.gmra.mrb[0].mxu0 %v395
  %v759 = vpop.f32.mrb[0].mxu0
  %v760 = vadd.f32 0.0, %v759
  %v761 = vpop.f32.mrb[0].mxu0
  %v762 = vadd.f32 0.0, %v761
  %763 = vmatprep.mubr.f32.mxu0 %v399
  %764 = vmatmul.mubr.f32.gmra.mrb[0].mxu0 %v398
  %v765 = vpop.f32.mrb[0].mxu0
  %v766 = vadd.f32 0.0, %v765
  %v767 = vpop.f32.mrb[0].mxu0
  %v768 = vadd.f32 0.0, %v767
  %769 = vmatprep.mubr.f32.mxu0 %v402
  %770 = vmatmul.mubr.f32.gmra.mrb[0].mxu0 %v401
  %v771 = vpop.f32.mrb[0].mxu0
  %v772 = vadd.f32 0.0, %v771
  %v773 = vpop.f32.mrb[0].mxu0
  %v774 = vadd.f32 0.0, %v773
  %775 = vmatprep.mubr.f32.mxu0 %v405
  %776 = vmatmul.mubr.f32.gmra.mrb[0].mxu0 %v404
  %v777 = vpop.f32.mrb[0].mxu0
  %v778 = vadd.f32 0.0, %v777
  %v779 = vpop.f32.mrb[0].mxu0
  %v780 = vadd.f32 0.0, %v779
  %781 = vmatprep.mubr.f32.mxu0 %v408
  %782 = vmatmul.mubr.f32.gmra.mrb[0].mxu0 %v407
  %v783 = vpop.f32.mrb[0].mxu0
  %v784 = vadd.f32 0.0, %v783
  %v785 = vpop.f32.mrb[0].mxu0
  %v786 = vadd.f32 0.0, %v785
  %787 = vmatprep.mubr.f32.mxu0 %v411
  %788 = vmatmul.mubr.f32.gmra.mrb[0].mxu0 %v410
  %v789 = vpop.f32.mrb[0].mxu0
  %v790 = vadd.f32 0.0, %v789
  %v791 = vpop.f32.mrb[0].mxu0
  %v792 = vadd.f32 0.0, %v791
  %793 = vmatprep.mubr.f32.mxu0 %v414
  %794 = vmatmul.mubr.f32.gmra.mrb[0].mxu0 %v413
  %v795 = vpop.f32.mrb[0].mxu0
  %v796 = vadd.f32 0.0, %v795
  %v797 = vpop.f32.mrb[0].mxu0
  %v798 = vadd.f32 0.0, %v797
  %799 = vmatprep.mubr.f32.mxu0 %v417
  %800 = vmatmul.mubr.f32.gmra.mrb[0].mxu0 %v416
  %v801 = vpop.f32.mrb[0].mxu0
  %v802 = vadd.f32 0.0, %v801
  %v803 = vpop.f32.mrb[0].mxu0
  %v804 = vadd.f32 0.0, %v803
  %805 = vmatprep.mubr.f32.mxu0 %v420
  %806 = vmatmul.mubr.f32.gmra.mrb[0].mxu0 %v419
  %v807 = vpop.f32.mrb[0].mxu0
  %v808 = vadd.f32 0.0, %v807
  %v809 = vpop.f32.mrb[0].mxu0
  %v810 = vadd.f32 0.0, %v809
  %811 = vmatprep.mubr.f32.mxu0 %v423
  %812 = vmatmul.mubr.f32.gmra.mrb[0].mxu0 %v422
  %v813 = vpop.f32.mrb[0].mxu0
  %v814 = vadd.f32 0.0, %v813
  %v815 = vpop.f32.mrb[0].mxu0
  %v816 = vadd.f32 0.0, %v815
  %817 = vmatprep.mubr.f32.mxu0 %v426
  %818 = vmatmul.mubr.f32.gmra.mrb[0].mxu0 %v425
  %v819 = vpop.f32.mrb[0].mxu0
  %v820 = vadd.f32 0.0, %v819
  %v821 = vpop.f32.mrb[0].mxu0
  %v822 = vadd.f32 0.0, %v821
  %823 = vmatprep.mubr.f32.mxu0 %v429
  %824 = vmatmul.mubr.f32.gmra.mrb[0].mxu0 %v428
  %v825 = vpop.f32.mrb[0].mxu0
  %v826 = vadd.f32 0.0, %v825
  %v827 = vpop.f32.mrb[0].mxu0
  %v828 = vadd.f32 0.0, %v827
  %829 = vmatprep.mubr.f32.mxu0 %v432
  %830 = vmatmul.mubr.f32.gmra.mrb[0].mxu0 %v431
  %v831 = vpop.f32.mrb[0].mxu0
  %v832 = vadd.f32 0.0, %v831
  %v833 = vpop.f32.mrb[0].mxu0
  %v834 = vadd.f32 0.0, %v833
  %835 = vmatprep.mubr.f32.mxu0 %v435
  %836 = vmatmul.mubr.f32.gmra.mrb[0].mxu0 %v434
  %v837 = vpop.f32.mrb[0].mxu0
  %v838 = vadd.f32 0.0, %v837
  %v839 = vpop.f32.mrb[0].mxu0
  %v840 = vadd.f32 0.0, %v839
  %841 = vmatprep.mubr.f32.mxu0 %v438
  %842 = vmatmul.mubr.f32.gmra.mrb[0].mxu0 %v437
  %v843 = vpop.f32.mrb[0].mxu0
  %v844 = vadd.f32 0.0, %v843
  %v845 = vpop.f32.mrb[0].mxu0
  %v846 = vadd.f32 0.0, %v845
  %847 = vmatprep.mubr.f32.mxu0 %v441
  %848 = vmatmul.mubr.f32.gmra.mrb[0].mxu0 %v440
  %v849 = vpop.f32.mrb[0].mxu0
  %v850 = vadd.f32 0.0, %v849
  %v851 = vpop.f32.mrb[0].mxu0
  %v852 = vadd.f32 0.0, %v851
  %853 = vmatprep.mubr.f32.mxu0 %v444
  %854 = vmatmul.mubr.f32.gmra.mrb[0].mxu0 %v443
  %v855 = vpop.f32.mrb[0].mxu0
  %v856 = vadd.f32 0.0, %v855
  %v857 = vpop.f32.mrb[0].mxu0
  %v858 = vadd.f32 0.0, %v857
  %859 = vmatprep.mubr.f32.mxu0 %v447
  %860 = vmatmul.mubr.f32.gmra.mrb[0].mxu0 %v446
  %v861 = vpop.f32.mrb[0].mxu0
  %v862 = vadd.f32 0.0, %v861
  %v863 = vpop.f32.mrb[0].mxu0
  %v864 = vadd.f32 0.0, %v863
  %865 = vmatprep.mubr.f32.mxu0 %v450
  %866 = vmatmul.mubr.f32.gmra.mrb[0].mxu0 %v449
  %v867 = vpop.f32.mrb[0].mxu0
  %v868 = vadd.f32 0.0, %v867
  %v869 = vpop.f32.mrb[0].mxu0
  %v870 = vadd.f32 0.0, %v869
  %871 = vmatprep.mubr.f32.mxu0 %v453
  %872 = vmatmul.mubr.f32.gmra.mrb[0].mxu0 %v452
  %v873 = vpop.f32.mrb[0].mxu0
  %v874 = vadd.f32 0.0, %v873
  %v875 = vpop.f32.mrb[0].mxu0
  %v876 = vadd.f32 0.0, %v875
  %877 = vmatprep.mubr.f32.mxu0 %v456
  %878 = vmatmul.mubr.f32.gmra.mrb[0].mxu0 %v455
  %v879 = vpop.f32.mrb[0].mxu0
  %v880 = vadd.f32 0.0, %v879
  %v881 = vpop.f32.mrb[0].mxu0
  %v882 = vadd.f32 0.0, %v881
  %883 = vmatprep.mubr.f32.mxu0 %v459
  %884 = vmatmul.mubr.f32.gmra.mrb[0].mxu0 %v458
  %v885 = vpop.f32.mrb[0].mxu0
  %v886 = vadd.f32 0.0, %v885
  %v887 = vpop.f32.mrb[0].mxu0
  %v888 = vadd.f32 0.0, %v887
  %889 = vmatprep.mubr.f32.mxu0 %v462
  %890 = vmatmul.mubr.f32.gmra.mrb[0].mxu0 %v461
  %v891 = vpop.f32.mrb[0].mxu0
  %v892 = vadd.f32 0.0, %v891
  %v893 = vpop.f32.mrb[0].mxu0
  %v894 = vadd.f32 0.0, %v893
  %895 = vmatprep.mubr.f32.mxu0 %v465
  %896 = vmatmul.mubr.f32.gmra.mrb[0].mxu0 %v464
  %v897 = vpop.f32.mrb[0].mxu0
  %v898 = vadd.f32 0.0, %v897
  %v899 = vpop.f32.mrb[0].mxu0
  %v900 = vadd.f32 0.0, %v899
  %901 = vmatprep.mubr.f32.mxu0 %v468
  %902 = vmatmul.mubr.f32.gmra.mrb[0].mxu0 %v467
  %v903 = vpop.f32.mrb[0].mxu0
  %v904 = vadd.f32 0.0, %v903
  %v905 = vpop.f32.mrb[0].mxu0
  %v906 = vadd.f32 0.0, %v905
  %907 = vmatprep.mubr.f32.mxu0 %v471
  %908 = vmatmul.mubr.f32.gmra.mrb[0].mxu0 %v470
  %v909 = vpop.f32.mrb[0].mxu0
  %v910 = vadd.f32 0.0, %v909
  %v911 = vpop.f32.mrb[0].mxu0
  %v912 = vadd.f32 0.0, %v911
  %913 = vmatprep.mubr.f32.mxu0 %v474
  %914 = vmatmul.mubr.f32.gmra.mrb[0].mxu0 %v473
  %v915 = vpop.f32.mrb[0].mxu0
  %v916 = vadd.f32 0.0, %v915
  %v917 = vpop.f32.mrb[0].mxu0
  %v918 = vadd.f32 0.0, %v917
  %919 = vdwg.mxu0
  %920 = vmatprep.subr.mxu0 %v331
  %921 = vmatpush1.msra.mxu0 %v330
  %922 = vmatprep.subr.mxu0 %v333
  %923 = vmatpush1.msra.mxu0 %v332
  %924 = vmatprep.subr.mxu0 %v335
  %925 = vmatpush1.msra.mxu0 %v334
  %926 = vmatprep.subr.mxu0 %v337
  %927 = vmatpush1.msra.mxu0 %v336
  %928 = vmatprep.subr.mxu0 %v339
  %929 = vmatpush1.msra.mxu0 %v338
  %930 = vmatprep.subr.mxu0 %v341
  %931 = vmatpush1.msra.mxu0 %v340
  %932 = vmatprep.subr.mxu0 %v343
  %933 = vmatpush1.msra.mxu0 %v342
  %934 = vmatprep.subr.mxu0 %v345
  %935 = vmatpush1.msra.mxu0 %v344
  %936 = vmatprep.subr.mxu0 %v347
  %937 = vmatpush1.msra.mxu0 %v346
  %938 = vmatprep.subr.mxu0 %v349
  %939 = vmatpush1.msra.mxu0 %v348
  %940 = vmatprep.subr.mxu0 0.0
  %941 = vmatpush1.msra.mxu0 0.0
  %942 = vmatprep.subr.mxu0 0.0
  %943 = vmatpush1.msra.mxu0 0.0
  %944 = vmatprep.subr.mxu0 0.0
  %945 = vmatpush1.msra.mxu0 0.0
  %946 = vmatprep.subr.mxu0 0.0
  %947 = vmatpush1.msra.mxu0 0.0
  %948 = vmatprep.subr.mxu0 0.0
  %949 = vmatpush1.msra.mxu0 0.0
  %950 = vmatprep.subr.mxu0 0.0
  %951 = vmatpush1.msra.mxu0 0.0
  %952 = vmatprep.subr.mxu0 0.0
  %953 = vmatpush1.msra.mxu0 0.0
  %954 = vmatprep.subr.mxu0 0.0
  %955 = vmatpush1.msra.mxu0 0.0
  %956 = vmatprep.subr.mxu0 0.0
  %957 = vmatpush1.msra.mxu0 0.0
  %958 = vmatprep.subr.mxu0 0.0
  %959 = vmatpush1.msra.mxu0 0.0
  %960 = vmatprep.subr.mxu0 0.0
  %961 = vmatpush1.msra.mxu0 0.0
  %962 = vmatprep.subr.mxu0 0.0
  %963 = vmatpush1.msra.mxu0 0.0
  %964 = vmatprep.subr.mxu0 0.0
  %965 = vmatpush1.msra.mxu0 0.0
  %966 = vmatprep.subr.mxu0 0.0
  %967 = vmatpush1.msra.mxu0 0.0
  %968 = vmatprep.subr.mxu0 0.0
  %969 = vmatpush1.msra.mxu0 0.0
  %970 = vmatprep.subr.mxu0 0.0
  %971 = vmatpush1.msra.mxu0 0.0
  %972 = vmatprep.subr.mxu0 0.0
  %973 = vmatpush1.msra.mxu0 0.0
  %974 = vmatprep.subr.mxu0 0.0
  %975 = vmatpush1.msra.mxu0 0.0
  %976 = vmatprep.subr.mxu0 0.0
  %977 = vmatpush1.msra.mxu0 0.0
  %978 = vmatprep.subr.mxu0 0.0
  %979 = vmatpush1.msra.mxu0 0.0
  %980 = vmatprep.subr.mxu0 0.0
  %981 = vmatpush1.msra.mxu0 0.0
  %982 = vmatprep.subr.mxu0 0.0
  %983 = vmatpush1.msra.mxu0 0.0
  %984 = vmatprep.mubr.f32.mxu0 0.0
  %985 = vmatmul.mubr.f32.gmra.mrb[0].mxu0 %v478
  %v986 = vpop.f32.mrb[0].mxu0
  %v987 = vadd.f32 %v670, %v986
  %v988 = vpop.f32.mrb[0].mxu0
  %v989 = vadd.f32 %v672, %v988
  %990 = vmatprep.mubr.f32.mxu0 0.0
  %991 = vmatmul.mubr.f32.gmra.mrb[0].mxu0 %v481
  %v992 = vpop.f32.mrb[0].mxu0
  %v993 = vadd.f32 %v676, %v992
  %v994 = vpop.f32.mrb[0].mxu0
  %v995 = vadd.f32 %v678, %v994
  %996 = vmatprep.mubr.f32.mxu0 0.0
  %997 = vmatmul.mubr.f32.gmra.mrb[0].mxu0 %v484
  %v998 = vpop.f32.mrb[0].mxu0
  %v999 = vadd.f32 %v682, %v998
  %v1000 = vpop.f32.mrb[0].mxu0
  %v1001 = vadd.f32 %v684, %v1000
  %1002 = vmatprep.mubr.f32.mxu0 0.0
  %1003 = vmatmul.mubr.f32.gmra.mrb[0].mxu0 %v487
  %v1004 = vpop.f32.mrb[0].mxu0
  %v1005 = vadd.f32 %v688, %v1004
  %v1006 = vpop.f32.mrb[0].mxu0
  %v1007 = vadd.f32 %v690, %v1006
  %1008 = vmatprep.mubr.f32.mxu0 0.0
  %1009 = vmatmul.mubr.f32.gmra.mrb[0].mxu0 %v490
  %v1010 = vpop.f32.mrb[0].mxu0
  %v1011 = vadd.f32 %v694, %v1010
  %v1012 = vpop.f32.mrb[0].mxu0
  %v1013 = vadd.f32 %v696, %v1012
  %1014 = vmatprep.mubr.f32.mxu0 0.0
  %1015 = vmatmul.mubr.f32.gmra.mrb[0].mxu0 %v493
  %v1016 = vpop.f32.mrb[0].mxu0
  %v1017 = vadd.f32 %v700, %v1016
  %v1018 = vpop.f32.mrb[0].mxu0
  %v1019 = vadd.f32 %v702, %v1018
  %1020 = vmatprep.mubr.f32.mxu0 0.0
  %1021 = vmatmul.mubr.f32.gmra.mrb[0].mxu0 %v496
  %v1022 = vpop.f32.mrb[0].mxu0
  %v1023 = vadd.f32 %v706, %v1022
  %v1024 = vpop.f32.mrb[0].mxu0
  %v1025 = vadd.f32 %v708, %v1024
  %1026 = vmatprep.mubr.f32.mxu0 0.0
  %1027 = vmatmul.mubr.f32.gmra.mrb[0].mxu0 %v499
  %v1028 = vpop.f32.mrb[0].mxu0
  %v1029 = vadd.f32 %v712, %v1028
  %v1030 = vpop.f32.mrb[0].mxu0
  %v1031 = vadd.f32 %v714, %v1030
  %1032 = vmatprep.mubr.f32.mxu0 0.0
  %1033 = vmatmul.mubr.f32.gmra.mrb[0].mxu0 %v502
  %v1034 = vpop.f32.mrb[0].mxu0
  %v1035 = vadd.f32 %v718, %v1034
  %v1036 = vpop.f32.mrb[0].mxu0
  %v1037 = vadd.f32 %v720, %v1036
  %1038 = vmatprep.mubr.f32.mxu0 0.0
  %1039 = vmatmul.mubr.f32.gmra.mrb[0].mxu0 %v505
  %v1040 = vpop.f32.mrb[0].mxu0
  %v1041 = vadd.f32 %v724, %v1040
  %v1042 = vpop.f32.mrb[0].mxu0
  %v1043 = vadd.f32 %v726, %v1042
  %1044 = vmatprep.mubr.f32.mxu0 0.0
  %1045 = vmatmul.mubr.f32.gmra.mrb[0].mxu0 %v508
  %v1046 = vpop.f32.mrb[0].mxu0
  %v1047 = vadd.f32 %v730, %v1046
  %v1048 = vpop.f32.mrb[0].mxu0
  %v1049 = vadd.f32 %v732, %v1048
  %1050 = vmatprep.mubr.f32.mxu0 0.0
  %1051 = vmatmul.mubr.f32.gmra.mrb[0].mxu0 %v511
  %v1052 = vpop.f32.mrb[0].mxu0
  %v1053 = vadd.f32 %v736, %v1052
  %v1054 = vpop.f32.mrb[0].mxu0
  %v1055 = vadd.f32 %v738, %v1054
  %1056 = vmatprep.mubr.f32.mxu0 0.0
  %1057 = vmatmul.mubr.f32.gmra.mrb[0].mxu0 %v514
  %v1058 = vpop.f32.mrb[0].mxu0
  %v1059 = vadd.f32 %v742, %v1058
  %v1060 = vpop.f32.mrb[0].mxu0
  %v1061 = vadd.f32 %v744, %v1060
  %1062 = vmatprep.mubr.f32.mxu0 0.0
  %1063 = vmatmul.mubr.f32.gmra.mrb[0].mxu0 %v517
  %v1064 = vpop.f32.mrb[0].mxu0
  %v1065 = vadd.f32 %v748, %v1064
  %v1066 = vpop.f32.mrb[0].mxu0
  %v1067 = vadd.f32 %v750, %v1066
  %1068 = vmatprep.mubr.f32.mxu0 0.0
  %1069 = vmatmul.mubr.f32.gmra.mrb[0].mxu0 %v520
  %v1070 = vpop.f32.mrb[0].mxu0
  %v1071 = vadd.f32 %v754, %v1070
  %v1072 = vpop.f32.mrb[0].mxu0
  %v1073 = vadd.f32 %v756, %v1072
  %1074 = vmatprep.mubr.f32.mxu0 0.0
  %1075 = vmatmul.mubr.f32.gmra.mrb[0].mxu0 %v523
  %v1076 = vpop.f32.mrb[0].mxu0
  %v1077 = vadd.f32 %v760, %v1076
  %v1078 = vpop.f32.mrb[0].mxu0
  %v1079 = vadd.f32 %v762, %v1078
  %1080 = vmatprep.mubr.f32.mxu0 0.0
  %1081 = vmatmul.mubr.f32.gmra.mrb[0].mxu0 %v526
  %v1082 = vpop.f32.mrb[0].mxu0
  %v1083 = vadd.f32 %v766, %v1082
  %v1084 = vpop.f32.mrb[0].mxu0
  %v1085 = vadd.f32 %v768, %v1084
  %1086 = vmatprep.mubr.f32.mxu0 0.0
  %1087 = vmatmul.mubr.f32.gmra.mrb[0].mxu0 %v529
  %v1088 = vpop.f32.mrb[0].mxu0
  %v1089 = vadd.f32 %v772, %v1088
  %v1090 = vpop.f32.mrb[0].mxu0
  %v1091 = vadd.f32 %v774, %v1090
  %1092 = vmatprep.mubr.f32.mxu0 0.0
  %1093 = vmatmul.mubr.f32.gmra.mrb[0].mxu0 %v532
  %v1094 = vpop.f32.mrb[0].mxu0
  %v1095 = vadd.f32 %v778, %v1094
  %v1096 = vpop.f32.mrb[0].mxu0
  %v1097 = vadd.f32 %v780, %v1096
  %1098 = vmatprep.mubr.f32.mxu0 0.0
  %1099 = vmatmul.mubr.f32.gmra.mrb[0].mxu0 %v535
  %v1100 = vpop.f32.mrb[0].mxu0
  %v1101 = vadd.f32 %v784, %v1100
  %v1102 = vpop.f32.mrb[0].mxu0
  %v1103 = vadd.f32 %v786, %v1102
  %1104 = vmatprep.mubr.f32.mxu0 0.0
  %1105 = vmatmul.mubr.f32.gmra.mrb[0].mxu0 %v538
  %v1106 = vpop.f32.mrb[0].mxu0
  %v1107 = vadd.f32 %v790, %v1106
  %v1108 = vpop.f32.mrb[0].mxu0
  %v1109 = vadd.f32 %v792, %v1108
  %1110 = vmatprep.mubr.f32.mxu0 0.0
  %1111 = vmatmul.mubr.f32.gmra.mrb[0].mxu0 %v541
  %v1112 = vpop.f32.mrb[0].mxu0
  %v1113 = vadd.f32 %v796, %v1112
  %v1114 = vpop.f32.mrb[0].mxu0
  %v1115 = vadd.f32 %v798, %v1114
  %1116 = vmatprep.mubr.f32.mxu0 0.0
  %1117 = vmatmul.mubr.f32.gmra.mrb[0].mxu0 %v544
  %v1118 = vpop.f32.mrb[0].mxu0
  %v1119 = vadd.f32 %v802, %v1118
  %v1120 = vpop.f32.mrb[0].mxu0
  %v1121 = vadd.f32 %v804, %v1120
  %1122 = vmatprep.mubr.f32.mxu0 0.0
  %1123 = vmatmul.mubr.f32.gmra.mrb[0].mxu0 %v547
  %v1124 = vpop.f32.mrb[0].mxu0
  %v1125 = vadd.f32 %v808, %v1124
  %v1126 = vpop.f32.mrb[0].mxu0
  %v1127 = vadd.f32 %v810, %v1126
  %1128 = vmatprep.mubr.f32.mxu0 0.0
  %1129 = vmatmul.mubr.f32.gmra.mrb[0].mxu0 %v550
  %v1130 = vpop.f32.mrb[0].mxu0
  %v1131 = vadd.f32 %v814, %v1130
  %v1132 = vpop.f32.mrb[0].mxu0
  %v1133 = vadd.f32 %v816, %v1132
  %1134 = vmatprep.mubr.f32.mxu0 0.0
  %1135 = vmatmul.mubr.f32.gmra.mrb[0].mxu0 %v553
  %v1136 = vpop.f32.mrb[0].mxu0
  %v1137 = vadd.f32 %v820, %v1136
  %v1138 = vpop.f32.mrb[0].mxu0
  %v1139 = vadd.f32 %v822, %v1138
  %1140 = vmatprep.mubr.f32.mxu0 0.0
  %1141 = vmatmul.mubr.f32.gmra.mrb[0].mxu0 %v556
  %v1142 = vpop.f32.mrb[0].mxu0
  %v1143 = vadd.f32 %v826, %v1142
  %v1144 = vpop.f32.mrb[0].mxu0
  %v1145 = vadd.f32 %v828, %v1144
  %1146 = vmatprep.mubr.f32.mxu0 0.0
  %1147 = vmatmul.mubr.f32.gmra.mrb[0].mxu0 %v559
  %v1148 = vpop.f32.mrb[0].mxu0
  %v1149 = vadd.f32 %v832, %v1148
  %v1150 = vpop.f32.mrb[0].mxu0
  %v1151 = vadd.f32 %v834, %v1150
  %1152 = vmatprep.mubr.f32.mxu0 0.0
  %1153 = vmatmul.mubr.f32.gmra.mrb[0].mxu0 %v562
  %v1154 = vpop.f32.mrb[0].mxu0
  %v1155 = vadd.f32 %v838, %v1154
  %v1156 = vpop.f32.mrb[0].mxu0
  %v1157 = vadd.f32 %v840, %v1156
  %1158 = vmatprep.mubr.f32.mxu0 0.0
  %1159 = vmatmul.mubr.f32.gmra.mrb[0].mxu0 %v565
  %v1160 = vpop.f32.mrb[0].mxu0
  %v1161 = vadd.f32 %v844, %v1160
  %v1162 = vpop.f32.mrb[0].mxu0
  %v1163 = vadd.f32 %v846, %v1162
  %1164 = vmatprep.mubr.f32.mxu0 0.0
  %1165 = vmatmul.mubr.f32.gmra.mrb[0].mxu0 %v568
  %v1166 = vpop.f32.mrb[0].mxu0
  %v1167 = vadd.f32 %v850, %v1166
  %v1168 = vpop.f32.mrb[0].mxu0
  %v1169 = vadd.f32 %v852, %v1168
  %1170 = vmatprep.mubr.f32.mxu0 0.0
  %1171 = vmatmul.mubr.f32.gmra.mrb[0].mxu0 %v571
  %v1172 = vpop.f32.mrb[0].mxu0
  %v1173 = vadd.f32 %v856, %v1172
  %v1174 = vpop.f32.mrb[0].mxu0
  %v1175 = vadd.f32 %v858, %v1174
  %1176 = vmatprep.mubr.f32.mxu0 0.0
  %1177 = vmatmul.mubr.f32.gmra.mrb[0].mxu0 %v574
  %v1178 = vpop.f32.mrb[0].mxu0
  %v1179 = vadd.f32 %v862, %v1178
  %v1180 = vpop.f32.mrb[0].mxu0
  %v1181 = vadd.f32 %v864, %v1180
  %1182 = vmatprep.mubr.f32.mxu0 0.0
  %1183 = vmatmul.mubr.f32.gmra.mrb[0].mxu0 %v577
  %v1184 = vpop.f32.mrb[0].mxu0
  %v1185 = vadd.f32 %v868, %v1184
  %v1186 = vpop.f32.mrb[0].mxu0
  %v1187 = vadd.f32 %v870, %v1186
  %1188 = vmatprep.mubr.f32.mxu0 0.0
  %1189 = vmatmul.mubr.f32.gmra.mrb[0].mxu0 %v580
  %v1190 = vpop.f32.mrb[0].mxu0
  %v1191 = vadd.f32 %v874, %v1190
  %v1192 = vpop.f32.mrb[0].mxu0
  %v1193 = vadd.f32 %v876, %v1192
  %1194 = vmatprep.mubr.f32.mxu0 0.0
  %1195 = vmatmul.mubr.f32.gmra.mrb[0].mxu0 %v583
  %v1196 = vpop.f32.mrb[0].mxu0
  %v1197 = vadd.f32 %v880, %v1196
  %v1198 = vpop.f32.mrb[0].mxu0
  %v1199 = vadd.f32 %v882, %v1198
  %1200 = vmatprep.mubr.f32.mxu0 0.0
  %1201 = vmatmul.mubr.f32.gmra.mrb[0].mxu0 %v586
  %v1202 = vpop.f32.mrb[0].mxu0
  %v1203 = vadd.f32 %v886, %v1202
  %v1204 = vpop.f32.mrb[0].mxu0
  %v1205 = vadd.f32 %v888, %v1204
  %1206 = vmatprep.mubr.f32.mxu0 0.0
  %1207 = vmatmul.mubr.f32.gmra.mrb[0].mxu0 %v589
  %v1208 = vpop.f32.mrb[0].mxu0
  %v1209 = vadd.f32 %v892, %v1208
  %v1210 = vpop.f32.mrb[0].mxu0
  %v1211 = vadd.f32 %v894, %v1210
  %1212 = vmatprep.mubr.f32.mxu0 0.0
  %1213 = vmatmul.mubr.f32.gmra.mrb[0].mxu0 %v592
  %v1214 = vpop.f32.mrb[0].mxu0
  %v1215 = vadd.f32 %v898, %v1214
  %v1216 = vpop.f32.mrb[0].mxu0
  %v1217 = vadd.f32 %v900, %v1216
  %1218 = vmatprep.mubr.f32.mxu0 0.0
  %1219 = vmatmul.mubr.f32.gmra.mrb[0].mxu0 %v595
  %v1220 = vpop.f32.mrb[0].mxu0
  %v1221 = vadd.f32 %v904, %v1220
  %v1222 = vpop.f32.mrb[0].mxu0
  %v1223 = vadd.f32 %v906, %v1222
  %1224 = vmatprep.mubr.f32.mxu0 0.0
  %1225 = vmatmul.mubr.f32.gmra.mrb[0].mxu0 %v598
  %v1226 = vpop.f32.mrb[0].mxu0
  %v1227 = vadd.f32 %v910, %v1226
  %v1228 = vpop.f32.mrb[0].mxu0
  %v1229 = vadd.f32 %v912, %v1228
  %1230 = vmatprep.mubr.f32.mxu0 0.0
  %1231 = vmatmul.mubr.f32.gmra.mrb[0].mxu0 %v601
  %v1232 = vpop.f32.mrb[0].mxu0
  %v1233 = vadd.f32 %v916, %v1232
  %v1234 = vpop.f32.mrb[0].mxu0
  %v1235 = vadd.f32 %v918, %v1234
  %1236 = vdwg.mxu0
  %1237 = vst [vmem:[%s3] sm:$0xff] %v987
  %vm1238 = vcmask 556032
  %1239 = vst.msk [vmem:[%s3 + $0x8] sm:$0xff] %vm1238, %v989
  %1240 = vst [vmem:[%s3 + $0x10] sm:$0xff] %v993
  %1241 = vst.msk [vmem:[%s3 + $0x18] sm:$0xff] %vm1238, %v995
  %1242 = vst [vmem:[%s3 + $0x20] sm:$0xff] %v999
  %1243 = vst.msk [vmem:[%s3 + $0x28] sm:$0xff] %vm1238, %v1001
  %1244 = vst [vmem:[%s3 + $0x30] sm:$0xff] %v1005
  %1245 = vst.msk [vmem:[%s3 + $0x38] sm:$0xff] %vm1238, %v1007
  %1246 = vst [vmem:[%s3 + $0x40] sm:$0xff] %v1011
  %1247 = vst.msk [vmem:[%s3 + $0x48] sm:$0xff] %vm1238, %v1013
  %1248 = vst [vmem:[%s3 + $0x50] sm:$0xff] %v1017
  %1249 = vst.msk [vmem:[%s3 + $0x58] sm:$0xff] %vm1238, %v1019
  %1250 = vst [vmem:[%s3 + $0x60] sm:$0xff] %v1023
  %1251 = vst.msk [vmem:[%s3 + $0x68] sm:$0xff] %vm1238, %v1025
  %1252 = vst [vmem:[%s3 + $0x70] sm:$0xff] %v1029
  %1253 = vst.msk [vmem:[%s3 + $0x78] sm:$0xff] %vm1238, %v1031
  %1254 = vst [vmem:[%s3 + $0x80] sm:$0xff] %v1035
  %1255 = vst.msk [vmem:[%s3 + $0x88] sm:$0xff] %vm1238, %v1037
  %1256 = vst [vmem:[%s3 + $0x90] sm:$0xff] %v1041
  %1257 = vst.msk [vmem:[%s3 + $0x98] sm:$0xff] %vm1238, %v1043
  %1258 = vst [vmem:[%s3 + $0xa0] sm:$0xff] %v1047
  %1259 = vst.msk [vmem:[%s3 + $0xa8] sm:$0xff] %vm1238, %v1049
  %1260 = vst [vmem:[%s3 + $0xb0] sm:$0xff] %v1053
  %1261 = vst.msk [vmem:[%s3 + $0xb8] sm:$0xff] %vm1238, %v1055
  %1262 = vst [vmem:[%s3 + $0xc0] sm:$0xff] %v1059
  %1263 = vst.msk [vmem:[%s3 + $0xc8] sm:$0xff] %vm1238, %v1061
  %1264 = vst [vmem:[%s3 + $0xd0] sm:$0xff] %v1065
  %1265 = vst.msk [vmem:[%s3 + $0xd8] sm:$0xff] %vm1238, %v1067
  %1266 = vst [vmem:[%s3 + $0xe0] sm:$0xff] %v1071
  %1267 = vst.msk [vmem:[%s3 + $0xe8] sm:$0xff] %vm1238, %v1073
  %1268 = vst [vmem:[%s3 + $0xf0] sm:$0xff] %v1077
  %1269 = vst.msk [vmem:[%s3 + $0xf8] sm:$0xff] %vm1238, %v1079
  %1270 = vst [vmem:[%s3 + $0x100] sm:$0xff] %v1083
  %1271 = vst.msk [vmem:[%s3 + $0x108] sm:$0xff] %vm1238, %v1085
  %1272 = vst [vmem:[%s3 + $0x110] sm:$0xff] %v1089
  %1273 = vst.msk [vmem:[%s3 + $0x118] sm:$0xff] %vm1238, %v1091
  %1274 = vst [vmem:[%s3 + $0x120] sm:$0xff] %v1095
  %1275 = vst.msk [vmem:[%s3 + $0x128] sm:$0xff] %vm1238, %v1097
  %1276 = vst [vmem:[%s3 + $0x130] sm:$0xff] %v1101
  %1277 = vst.msk [vmem:[%s3 + $0x138] sm:$0xff] %vm1238, %v1103
  %1278 = vst [vmem:[%s3 + $0x140] sm:$0xff] %v1107
  %1279 = vst.msk [vmem:[%s3 + $0x148] sm:$0xff] %vm1238, %v1109
  %1280 = vst [vmem:[%s3 + $0x150] sm:$0xff] %v1113
  %1281 = vst.msk [vmem:[%s3 + $0x158] sm:$0xff] %vm1238, %v1115
  %1282 = vst [vmem:[%s3 + $0x160] sm:$0xff] %v1119
  %1283 = vst.msk [vmem:[%s3 + $0x168] sm:$0xff] %vm1238, %v1121
  %1284 = vst [vmem:[%s3 + $0x170] sm:$0xff] %v1125
  %1285 = vst.msk [vmem:[%s3 + $0x178] sm:$0xff] %vm1238, %v1127
  %1286 = vst [vmem:[%s3 + $0x180] sm:$0xff] %v1131
  %1287 = vst.msk [vmem:[%s3 + $0x188] sm:$0xff] %vm1238, %v1133
  %1288 = vst [vmem:[%s3 + $0x190] sm:$0xff] %v1137
  %1289 = vst.msk [vmem:[%s3 + $0x198] sm:$0xff] %vm1238, %v1139
  %1290 = vst [vmem:[%s3 + $0x1a0] sm:$0xff] %v1143
  %1291 = vst.msk [vmem:[%s3 + $0x1a8] sm:$0xff] %vm1238, %v1145
  %1292 = vst [vmem:[%s3 + $0x1b0] sm:$0xff] %v1149
  %1293 = vst.msk [vmem:[%s3 + $0x1b8] sm:$0xff] %vm1238, %v1151
  %1294 = vst [vmem:[%s3 + $0x1c0] sm:$0xff] %v1155
  %1295 = vst.msk [vmem:[%s3 + $0x1c8] sm:$0xff] %vm1238, %v1157
  %1296 = vst [vmem:[%s3 + $0x1d0] sm:$0xff] %v1161
  %1297 = vst.msk [vmem:[%s3 + $0x1d8] sm:$0xff] %vm1238, %v1163
  %1298 = vst [vmem:[%s3 + $0x1e0] sm:$0xff] %v1167
  %1299 = vst.msk [vmem:[%s3 + $0x1e8] sm:$0xff] %vm1238, %v1169
  %1300 = vst [vmem:[%s3 + $0x1f0] sm:$0xff] %v1173
  %1301 = vst.msk [vmem:[%s3 + $0x1f8] sm:$0xff] %vm1238, %v1175
  %1302 = vst [vmem:[%s3 + $0x200] sm:$0xff] %v1179
  %1303 = vst.msk [vmem:[%s3 + $0x208] sm:$0xff] %vm1238, %v1181
  %1304 = vst [vmem:[%s3 + $0x210] sm:$0xff] %v1185
  %1305 = vst.msk [vmem:[%s3 + $0x218] sm:$0xff] %vm1238, %v1187
  %1306 = vst [vmem:[%s3 + $0x220] sm:$0xff] %v1191
  %1307 = vst.msk [vmem:[%s3 + $0x228] sm:$0xff] %vm1238, %v1193
  %1308 = vst [vmem:[%s3 + $0x230] sm:$0xff] %v1197
  %1309 = vst.msk [vmem:[%s3 + $0x238] sm:$0xff] %vm1238, %v1199
  %1310 = vst [vmem:[%s3 + $0x240] sm:$0xff] %v1203
  %1311 = vst.msk [vmem:[%s3 + $0x248] sm:$0xff] %vm1238, %v1205
  %1312 = vst [vmem:[%s3 + $0x250] sm:$0xff] %v1209
  %1313 = vst.msk [vmem:[%s3 + $0x258] sm:$0xff] %vm1238, %v1211
  %1314 = vst [vmem:[%s3 + $0x260] sm:$0xff] %v1215
  %1315 = vst.msk [vmem:[%s3 + $0x268] sm:$0xff] %vm1238, %v1217
  %1316 = vst [vmem:[%s3 + $0x270] sm:$0xff] %v1221
  %1317 = vst.msk [vmem:[%s3 + $0x278] sm:$0xff] %vm1238, %v1223
  %1318 = vst [vmem:[%s3 + $0x280] sm:$0xff] %v1227
  %1319 = vst.msk [vmem:[%s3 + $0x288] sm:$0xff] %vm1238, %v1229
  %1320 = vst [vmem:[%s3 + $0x290] sm:$0xff] %v1233
  %1321 = vst.msk [vmem:[%s3 + $0x298] sm:$0xff] %vm1238, %v1235
  // Predicated region
  $region14: #{tpu_custom_call.1} parent=0 // pred_check
    _
  $region15: #{tpu_custom_call.1} parent=0 // pred_check_branch
    %1323 = sbr.rel (0) target = $region17
  $region16: #{tpu_custom_call.1} parent=0 // pred_region
    _
  $region17: #{tpu_custom_call.1} parent=0 // pred_fallthru
    _
  // Predicated region
  $region18: #{tpu_custom_call.1} parent=0 // pred_check
    _
  $region19: #{tpu_custom_call.1} parent=0 // pred_check_branch
    %1325 = sbr.rel (0) target = $region21
  $region20: #{tpu_custom_call.1} parent=0 // pred_region
    _
  $region21: #{tpu_custom_call.1} parent=0 // pred_fallthru
    _

</llo_original>
